<compile_context>
chip_gen: v6e
topology: v6e:2x2x1
jax: 0.10.0
libtpu: 0.0.40
codegen_flags: <defaults>
</compile_context>

<pallas_src>
import jax
import jax.numpy as jnp
from jax.experimental import pallas as pl
from jax.experimental.pallas import tpu as pltpu

NUM_CLASSES = 10
_BIG_RSQ = 1e30  # pad value for ||x_ref||^2 of padded columns -> exp() underflows to 0


def _round_up(v, m):
    return ((v + m - 1) // m) * m


def _pad_axis(a, target, axis, value=0):
    pad = target - a.shape[axis]
    if pad <= 0:
        return a
    widths = [(0, 0)] * a.ndim
    widths[axis] = (0, pad)
    return jnp.pad(a, widths, constant_values=value)


def _make_ask_kernel(temperature):
    neg_inv_t = -1.0 / float(temperature)

    def kernel(x_ref, xrt_ref, xsq_ref, rsq_ref, yq_ref, yr_ref,
               out_ref, m_sc, num_sc, den_sc):
        k = pl.program_id(1)

        @pl.when(k == 0)
        def _init():
            m_sc[...] = jnp.full_like(m_sc, -jnp.inf)
            num_sc[...] = jnp.zeros_like(num_sc)
            den_sc[...] = jnp.zeros_like(den_sc)

        # ---- pairwise squared L2 for this (TM, TN) tile (MXU matmul) ----
        dots = jnp.dot(x_ref[...], xrt_ref[...],
                       preferred_element_type=jnp.float32)          # (TM, TN)
        dist2 = xsq_ref[...] - 2.0 * dots + rsq_ref[...]             # (TM,1)+(1,TN) bcast
        dist = jnp.sqrt(jnp.maximum(dist2, 0.0))                     # clamp fp rounding
        score = dist * neg_inv_t                                     # <= 0

        # label match mask: (TM,1) int32 vs (1,TN) int32 -> (TM,TN) bool
        match = yq_ref[...] == yr_ref[...]

        # ---- online softmax: only masked numerator + denominator kept ----
        tile_max = jnp.max(score, axis=1, keepdims=True)
        m_new = jnp.maximum(m_sc[...], tile_max)
        alpha = jnp.exp(m_sc[...] - m_new)
        e = jnp.exp(score - m_new)
        den_sc[...] = alpha * den_sc[...] + jnp.sum(e, axis=1, keepdims=True)
        num_sc[...] = alpha * num_sc[...] + jnp.sum(
            jnp.where(match, e, 0.0), axis=1, keepdims=True)
        m_sc[...] = m_new

        @pl.when(k == pl.num_programs(1) - 1)
        def _finalize():
            picked = num_sc[...] * pl.reciprocal(den_sc[...], approx=True) + 1e-6
            out_ref[...] = -jnp.log(picked)                          # per-row NLL

    return kernel


def ask_loss(x, y, x_ref, y_ref, *, temperature=1.0, tm=128, tn=512,
             matmul_bf16=None):
    """x: (M, D) f32, y: (M,) int, x_ref: (N, D) f32, y_ref: (N,) int -> scalar f32."""
    M, D = x.shape
    N, D2 = x_ref.shape
    assert D == D2

    x = x.astype(jnp.float32)
    x_r = x_ref.astype(jnp.float32)

    # ---- tile sizes / padded extents (D -> 128k lanes, M -> 8k sublanes) ----
    Dp = _round_up(D, 128)
    tm = _round_up(max(8, min(tm, _round_up(M, 8))), 8)
    tn = _round_up(max(128, min(tn, _round_up(N, 128))), 128)
    Mp = _round_up(M, tm)
    Np = _round_up(N, tn)

    if matmul_bf16 is None:
        matmul_bf16 = D >= 256  # only worth it when the MXU (not EUP) binds
    mm_dtype = jnp.bfloat16 if matmul_bf16 else jnp.float32

    # ---- squared norms in f32 (computed before any bf16 cast) ----
    xsq = _pad_axis(jnp.sum(x * x, axis=1, keepdims=True), Mp, 0, 0.0)      # (Mp, 1)
    rsq = _pad_axis(jnp.sum(x_r * x_r, axis=1).reshape(1, N), Np, 1, _BIG_RSQ)  # (1, Np)

    # ---- feature matrices: zero-pad, pre-transpose RHS, optional bf16 cast ----
    x_p = _pad_axis(_pad_axis(x, Dp, 1), Mp, 0).astype(mm_dtype)            # (Mp, Dp)
    xrt = _pad_axis(_pad_axis(x_r, Dp, 1), Np, 0).T.astype(mm_dtype)        # (Dp, Np)

    # ---- labels: query labels as column, reference labels as lane-dense row ----
    yq = _pad_axis(y.astype(jnp.int32).reshape(M, 1), Mp, 0, 0)             # (Mp, 1)
    yr = _pad_axis(y_ref.astype(jnp.int32).reshape(1, N), Np, 1, -1)        # (1, Np)

    grid = (Mp // tm, Np // tn)
    itemsize = 2 if matmul_bf16 else 4
    cost = pl.CostEstimate(
        flops=int(2 * Mp * Np * Dp + 8 * Mp * Np),
        transcendentals=int(2 * Mp * Np),           # sqrt + exp per (i, j)
        bytes_accessed=int(itemsize * (Mp * Dp + Dp * Np * grid[0])
                           + 4 * (2 * Mp + 2 * Np + Mp)),
    )

    per_row = pl.pallas_call(
        _make_ask_kernel(temperature),
        out_shape=jax.ShapeDtypeStruct((Mp, 1), jnp.float32),
        grid_spec=pltpu.PrefetchScalarGridSpec(
            num_scalar_prefetch=0,
            grid=grid,
            in_specs=[
                pl.BlockSpec((tm, Dp), lambda i, k: (i, 0)),   # x tile
                pl.BlockSpec((Dp, tn), lambda i, k: (0, k)),   # x_ref^T tile
                pl.BlockSpec((tm, 1), lambda i, k: (i, 0)),    # ||x||^2
                pl.BlockSpec((1, tn), lambda i, k: (0, k)),    # ||x_ref||^2 row
                pl.BlockSpec((tm, 1), lambda i, k: (i, 0)),    # y column
                pl.BlockSpec((1, tn), lambda i, k: (0, k)),    # y_ref row
            ],
            out_specs=pl.BlockSpec((tm, 1), lambda i, k: (i, 0)),
            scratch_shapes=[pltpu.VMEM((tm, 1), jnp.float32)] * 3,  # m, num, den
        ),
        compiler_params=pltpu.CompilerParams(
            dimension_semantics=("parallel", "arbitrary"),
            vmem_limit_bytes=32 * 1024 * 1024,
        ),
        cost_estimate=cost,
    )(x_p, xrt, xsq, rsq, yq, yr)

    # reduction='mean' over the real (un-padded) query rows
    return jnp.sum(per_row[:M, 0]) / float(M)


def ask_loss_reference(x, y, x_ref, y_ref, *, temperature=1.0):
    """Pure-JAX reference of the same forward path, for verification."""
    xsq = jnp.sum(x * x, axis=1, keepdims=True)
    rsq = jnp.sum(x_ref * x_ref, axis=1, keepdims=True)
    dist = jnp.sqrt(jnp.maximum(xsq - 2.0 * x @ x_ref.T + rsq.T, 0.0))
    score = -dist / temperature
    p = jax.nn.softmax(score, axis=1)
    onehot = (y_ref[:, None] == jnp.arange(NUM_CLASSES)[None, :]).astype(jnp.float32)
    soft_nns = p @ onehot + 1e-6
    picked = soft_nns[jnp.arange(x.shape[0]), y]
    return -jnp.mean(jnp.log(picked))


if __name__ == "__main__":
    key = jax.random.PRNGKey(0)
    kx, kxr, ky, kyr = jax.random.split(key, 4)

    # small demo shapes; tm=8 / tn=128 force a (3, 3) grid so the online-softmax
    # accumulation and padding/masking paths are actually exercised.
    M, N, D = 24, 300, 48
    x = jax.random.normal(kx, (M, D), dtype=jnp.float32)
    x_ref = jax.random.normal(kxr, (N, D), dtype=jnp.float32)
    y = jax.random.randint(ky, (M,), 0, NUM_CLASSES, dtype=jnp.int32)
    y_ref = jax.random.randint(kyr, (N,), 0, NUM_CLASSES, dtype=jnp.int32)

    out = ask_loss(x, y, x_ref, y_ref, temperature=1.0, tm=8, tn=128)
    out = jax.block_until_ready(out)

    ref = ask_loss_reference(x, y, x_ref, y_ref, temperature=1.0)
    # tolerance accounts for the approximate EUP reciprocal in the normalization
    assert jnp.allclose(out, ref, rtol=2e-3, atol=1e-5), (out, ref)

    print("KERNEL_OK")
</pallas_src>

<mosaic_0001>
module attributes {stable_mosaic.version = 11 : i64} {
  func.func @kernel(%arg0: i32, %arg1: i32, %arg2: memref<8x128xf32, #tpu.memory_space<vmem>>, %arg3: memref<128x128xf32, #tpu.memory_space<vmem>>, %arg4: memref<8x1xf32, #tpu.memory_space<vmem>>, %arg5: memref<1x128xf32, #tpu.memory_space<vmem>>, %arg6: memref<8x1xi32, #tpu.memory_space<vmem>>, %arg7: memref<1x128xi32, #tpu.memory_space<vmem>>, %arg8: memref<8x1xf32, #tpu.memory_space<vmem>>, %arg9: memref<8x1xf32, #tpu.memory_space<vmem>>, %arg10: memref<8x1xf32, #tpu.memory_space<vmem>>, %arg11: memref<8x1xf32, #tpu.memory_space<vmem>>) attributes {dimension_semantics = [#tpu.dimension_semantics<parallel>, #tpu.dimension_semantics<arbitrary>], iteration_bounds = array<i64: 3, 3>, scalar_prefetch = 0 : i64, scratch_operands = 3 : i64, tpu.core_type = #tpu.core_type<tc>, window_params = [{transform_indices = @transform_0, window_bounds = array<i64: 8, 128>}, {transform_indices = @transform_1, window_bounds = array<i64: 128, 128>}, {transform_indices = @transform_2, window_bounds = array<i64: 8, 1>}, {transform_indices = @transform_3, window_bounds = array<i64: 1, 128>}, {transform_indices = @transform_4, window_bounds = array<i64: 8, 1>}, {transform_indices = @transform_5, window_bounds = array<i64: 1, 128>}, {transform_indices = @transform_6, window_bounds = array<i64: 8, 1>}]} {
    %c0_i32 = arith.constant 0 : i32
    %0 = arith.cmpi eq, %arg1, %c0_i32 : i32
    %1 = arith.extui %0 : i1 to i32
    %c0_i32_0 = arith.constant 0 : i32
    %2 = arith.cmpi ne, %1, %c0_i32_0 : i32
    scf.if %2 {
      %cst_34 = arith.constant 0xFF800000 : f32
      %52 = vector.broadcast %cst_34 : f32 to vector<8x1xf32>
      %c0_35 = arith.constant 0 : index
      %c0_36 = arith.constant 0 : index
      %53 = vector.load %arg9[%c0_35, %c0_36] : memref<8x1xf32, #tpu.memory_space<vmem>>, vector<8x1xf32>
      tpu.vector_store %arg9[%c0_35, %c0_36], %52 {strides = array<i32>} : memref<8x1xf32, #tpu.memory_space<vmem>>, vector<8x1xf32>,
      %cst_37 = arith.constant 0.000000e+00 : f32
      %54 = vector.broadcast %cst_37 : f32 to vector<8x1xf32>
      %c0_38 = arith.constant 0 : index
      %c0_39 = arith.constant 0 : index
      %55 = vector.load %arg10[%c0_38, %c0_39] : memref<8x1xf32, #tpu.memory_space<vmem>>, vector<8x1xf32>
      tpu.vector_store %arg10[%c0_38, %c0_39], %54 {strides = array<i32>} : memref<8x1xf32, #tpu.memory_space<vmem>>, vector<8x1xf32>,
      %cst_40 = arith.constant 0.000000e+00 : f32
      %56 = vector.broadcast %cst_40 : f32 to vector<8x1xf32>
      %c0_41 = arith.constant 0 : index
      %c0_42 = arith.constant 0 : index
      %57 = vector.load %arg11[%c0_41, %c0_42] : memref<8x1xf32, #tpu.memory_space<vmem>>, vector<8x1xf32>
      tpu.vector_store %arg11[%c0_41, %c0_42], %56 {strides = array<i32>} : memref<8x1xf32, #tpu.memory_space<vmem>>, vector<8x1xf32>,
    } else {
    }
    %c0 = arith.constant 0 : index
    %c0_1 = arith.constant 0 : index
    %3 = vector.load %arg2[%c0, %c0_1] : memref<8x128xf32, #tpu.memory_space<vmem>>, vector<8x128xf32>
    %c0_2 = arith.constant 0 : index
    %c0_3 = arith.constant 0 : index
    %4 = vector.load %arg3[%c0_2, %c0_3] : memref<128x128xf32, #tpu.memory_space<vmem>>, vector<128x128xf32>
    %cst = arith.constant dense<0.000000e+00> : vector<8x128xf32>
    %5 = tpu.matmul %3, %4, %cst {dimension_numbers = #tpu.dot_dimension_numbers<[1], [0], [0], [1], [0, 0, 1, 1], [], []>} : vector<8x128xf32>, vector<128x128xf32>, vector<8x128xf32> -> vector<8x128xf32>
    %c0_4 = arith.constant 0 : index
    %c0_5 = arith.constant 0 : index
    %6 = vector.load %arg4[%c0_4, %c0_5] : memref<8x1xf32, #tpu.memory_space<vmem>>, vector<8x1xf32>
    %cst_6 = arith.constant 2.000000e+00 : f32
    %7 = vector.broadcast %cst_6 : f32 to vector<8x128xf32>
    %8 = arith.mulf %7, %5 : vector<8x128xf32>
    %9 = vector.broadcast %6 : vector<8x1xf32> to vector<8x128xf32>
    %10 = arith.subf %9, %8 : vector<8x128xf32>
    %c0_7 = arith.constant 0 : index
    %c0_8 = arith.constant 0 : index
    %11 = vector.load %arg5[%c0_7, %c0_8] : memref<1x128xf32, #tpu.memory_space<vmem>>, vector<1x128xf32>
    %12 = vector.broadcast %11 : vector<1x128xf32> to vector<8x128xf32>
    %13 = arith.addf %10, %12 : vector<8x128xf32>
    %cst_9 = arith.constant 0.000000e+00 : f32
    %14 = vector.broadcast %cst_9 : f32 to vector<8x128xf32>
    %15 = arith.maximumf %13, %14 : vector<8x128xf32>
    %16 = math.sqrt %15 : vector<8x128xf32>
    %cst_10 = arith.constant -1.000000e+00 : f32
    %17 = vector.broadcast %cst_10 : f32 to vector<8x128xf32>
    %18 = arith.mulf %16, %17 : vector<8x128xf32>
    %c0_11 = arith.constant 0 : index
    %c0_12 = arith.constant 0 : index
    %19 = vector.load %arg6[%c0_11, %c0_12] : memref<8x1xi32, #tpu.memory_space<vmem>>, vector<8x1xi32>
    %c0_13 = arith.constant 0 : index
    %c0_14 = arith.constant 0 : index
    %20 = vector.load %arg7[%c0_13, %c0_14] : memref<1x128xi32, #tpu.memory_space<vmem>>, vector<1x128xi32>
    %21 = vector.broadcast %19 : vector<8x1xi32> to vector<8x128xi32>
    %22 = vector.broadcast %20 : vector<1x128xi32> to vector<8x128xi32>
    %23 = arith.cmpi eq, %21, %22 : vector<8x128xi32>
    %cst_15 = arith.constant dense<0xFF800000> : vector<8xf32>
    %24 = vector.multi_reduction <maximumf>, %18, %cst_15 [1] : vector<8x128xf32> to vector<8xf32>
    %25 = vector.shape_cast %24 : vector<8xf32> to vector<8x1xf32>
    %c0_16 = arith.constant 0 : index
    %c0_17 = arith.constant 0 : index
    %26 = vector.load %arg9[%c0_16, %c0_17] : memref<8x1xf32, #tpu.memory_space<vmem>>, vector<8x1xf32>
    %27 = arith.maximumf %26, %25 : vector<8x1xf32>
    %c0_18 = arith.constant 0 : index
    %c0_19 = arith.constant 0 : index
    %28 = vector.load %arg9[%c0_18, %c0_19] : memref<8x1xf32, #tpu.memory_space<vmem>>, vector<8x1xf32>
    %29 = arith.subf %28, %27 : vector<8x1xf32>
    %30 = math.exp %29 : vector<8x1xf32>
    %31 = vector.broadcast %27 : vector<8x1xf32> to vector<8x128xf32>
    %32 = arith.subf %18, %31 : vector<8x128xf32>
    %33 = math.exp %32 : vector<8x128xf32>
    %c0_20 = arith.constant 0 : index
    %c0_21 = arith.constant 0 : index
    %34 = vector.load %arg11[%c0_20, %c0_21] : memref<8x1xf32, #tpu.memory_space<vmem>>, vector<8x1xf32>
    %35 = arith.mulf %30, %34 : vector<8x1xf32>
    %cst_22 = arith.constant dense<0.000000e+00> : vector<8xf32>
    %36 = vector.multi_reduction <add>, %33, %cst_22 [1] : vector<8x128xf32> to vector<8xf32>
    %37 = vector.shape_cast %36 : vector<8xf32> to vector<8x1xf32>
    %38 = arith.addf %35, %37 : vector<8x1xf32>
    %c0_23 = arith.constant 0 : index
    %c0_24 = arith.constant 0 : index
    %39 = vector.load %arg11[%c0_23, %c0_24] : memref<8x1xf32, #tpu.memory_space<vmem>>, vector<8x1xf32>
    tpu.vector_store %arg11[%c0_23, %c0_24], %38 {strides = array<i32>} : memref<8x1xf32, #tpu.memory_space<vmem>>, vector<8x1xf32>,
    %c0_25 = arith.constant 0 : index
    %c0_26 = arith.constant 0 : index
    %40 = vector.load %arg10[%c0_25, %c0_26] : memref<8x1xf32, #tpu.memory_space<vmem>>, vector<8x1xf32>
    %41 = arith.mulf %30, %40 : vector<8x1xf32>
    %cst_27 = arith.constant 0.000000e+00 : f32
    %42 = vector.broadcast %cst_27 : f32 to vector<8x128xf32>
    %43 = arith.select %23, %33, %42 : vector<8x128xi1>, vector<8x128xf32>
    %cst_28 = arith.constant dense<0.000000e+00> : vector<8xf32>
    %44 = vector.multi_reduction <add>, %43, %cst_28 [1] : vector<8x128xf32> to vector<8xf32>
    %45 = vector.shape_cast %44 : vector<8xf32> to vector<8x1xf32>
    %46 = arith.addf %41, %45 : vector<8x1xf32>
    %c0_29 = arith.constant 0 : index
    %c0_30 = arith.constant 0 : index
    %47 = vector.load %arg10[%c0_29, %c0_30] : memref<8x1xf32, #tpu.memory_space<vmem>>, vector<8x1xf32>
    tpu.vector_store %arg10[%c0_29, %c0_30], %46 {strides = array<i32>} : memref<8x1xf32, #tpu.memory_space<vmem>>, vector<8x1xf32>,
    %c0_31 = arith.constant 0 : index
    %c0_32 = arith.constant 0 : index
    %48 = vector.load %arg9[%c0_31, %c0_32] : memref<8x1xf32, #tpu.memory_space<vmem>>, vector<8x1xf32>
    tpu.vector_store %arg9[%c0_31, %c0_32], %27 {strides = array<i32>} : memref<8x1xf32, #tpu.memory_space<vmem>>, vector<8x1xf32>,
    %c2_i32 = arith.constant 2 : i32
    %49 = arith.cmpi eq, %arg1, %c2_i32 : i32
    %50 = arith.extui %49 : i1 to i32
    %c0_i32_33 = arith.constant 0 : i32
    %51 = arith.cmpi ne, %50, %c0_i32_33 : i32
    scf.if %51 {
      %c0_34 = arith.constant 0 : index
      %c0_35 = arith.constant 0 : index
      %52 = vector.load %arg10[%c0_34, %c0_35] : memref<8x1xf32, #tpu.memory_space<vmem>>, vector<8x1xf32>
      %c0_36 = arith.constant 0 : index
      %c0_37 = arith.constant 0 : index
      %53 = vector.load %arg11[%c0_36, %c0_37] : memref<8x1xf32, #tpu.memory_space<vmem>>, vector<8x1xf32>
      %54 = tpu.reciprocal %53 {approx = true} : vector<8x1xf32> -> vector<8x1xf32>
      %55 = arith.mulf %52, %54 : vector<8x1xf32>
      %cst_38 = arith.constant 9.99999997E-7 : f32
      %56 = vector.broadcast %cst_38 : f32 to vector<8x1xf32>
      %57 = arith.addf %55, %56 : vector<8x1xf32>
      %58 = math.log %57 : vector<8x1xf32>
      %cst_39 = arith.constant 0.000000e+00 : f32
      %59 = vector.broadcast %cst_39 : f32 to vector<8x1xf32>
      %60 = arith.subf %59, %58 : vector<8x1xf32>
      %c0_40 = arith.constant 0 : index
      %c0_41 = arith.constant 0 : index
      %61 = vector.load %arg8[%c0_40, %c0_41] : memref<8x1xf32, #tpu.memory_space<vmem>>, vector<8x1xf32>
      tpu.vector_store %arg8[%c0_40, %c0_41], %60 {strides = array<i32>} : memref<8x1xf32, #tpu.memory_space<vmem>>, vector<8x1xf32>,
    } else {
    }
    return
  }
  func.func @transform_0(%arg0: i32, %arg1: i32) -> (i32, i32) {
    %c0_i32 = arith.constant 0 : i32
    %c0_i32_0 = arith.constant 0 : i32
    return %arg0, %c0_i32 : i32, i32
  }
  func.func @transform_1(%arg0: i32, %arg1: i32) -> (i32, i32) {
    %c0_i32 = arith.constant 0 : i32
    %c0_i32_0 = arith.constant 0 : i32
    return %c0_i32, %arg1 : i32, i32
  }
  func.func @transform_2(%arg0: i32, %arg1: i32) -> (i32, i32) {
    %c0_i32 = arith.constant 0 : i32
    %c0_i32_0 = arith.constant 0 : i32
    return %arg0, %c0_i32 : i32, i32
  }
  func.func @transform_3(%arg0: i32, %arg1: i32) -> (i32, i32) {
    %c0_i32 = arith.constant 0 : i32
    %c0_i32_0 = arith.constant 0 : i32
    return %c0_i32, %arg1 : i32, i32
  }
  func.func @transform_4(%arg0: i32, %arg1: i32) -> (i32, i32) {
    %c0_i32 = arith.constant 0 : i32
    %c0_i32_0 = arith.constant 0 : i32
    return %arg0, %c0_i32 : i32, i32
  }
  func.func @transform_5(%arg0: i32, %arg1: i32) -> (i32, i32) {
    %c0_i32 = arith.constant 0 : i32
    %c0_i32_0 = arith.constant 0 : i32
    return %c0_i32, %arg1 : i32, i32
  }
  func.func @transform_6(%arg0: i32, %arg1: i32) -> (i32, i32) {
    %c0_i32 = arith.constant 0 : i32
    %c0_i32_0 = arith.constant 0 : i32
    return %arg0, %c0_i32 : i32, i32
  }
}

</mosaic_0001>

<llo_original>
// kernel: tpu_custom_call.1
$region0: #{tpu_custom_call.1}
  #allocation0 [shape = 'u32[]', space=smem, size = 0x4, offset = 0x4, fixed_abs, tag = 'smem constant byte address 0x4 - core index']
  #allocation1 [shape = 'u32[144,128]{1,0:T(1,128)}', space=vmem, size = 0x12000, scoped, tag = 'internal scratch']
  #allocation2 [shape = 'f32[8,1]{1,0:T(8,128)}', space=vmem, size = 0x1000, scoped, tag = 'scratch operand']
  #allocation3 [shape = 'f32[8,1]{1,0:T(8,128)}', space=vmem, size = 0x1000, scoped, tag = 'scratch operand']
  #allocation4 [shape = 'f32[8,1]{1,0:T(8,128)}', space=vmem, size = 0x1000, scoped, tag = 'scratch operand']
  %s0 = inlined_call_operand.vmem [shape: f32[24,128], index: 0, kind: input, shape index: {}]
  %s1 = inlined_call_operand.hbm [shape: f32[128,384], index: 1, kind: input, shape index: {}]
  %s2 = inlined_call_operand.vmem [shape: f32[24,1], index: 2, kind: input, shape index: {}]
  %s3 = inlined_call_operand.vmem [shape: f32[1,384], index: 3, kind: input, shape index: {}]
  %s4 = inlined_call_operand.vmem [shape: s32[24,1], index: 4, kind: input, shape index: {}]
  %s5 = inlined_call_operand.vmem [shape: s32[1,384], index: 5, kind: input, shape index: {}]
  %s6 = inlined_call_operand.vmem [shape: f32[24,1], index: 6, kind: output, shape index: {}]
  %s7 = sld [smem:[#allocation0]]
  $region69: #{tpu_custom_call.1} parent=0
    _
  %s9 = ssub.s32 1, %s7
  %s10 = scalar_select 0, %s9, %s7
  $region1: #{tpu_custom_call.1} parent=0
    #allocation5 [shape = 'u8[131072]{0}', space=vmem, size = 0x20000, scoped, tag = 'input window, operand 1']
    #allocation6 [shape = 's32[2]{0}', space=sflag, size = 0x8, scoped, tag = 'scoped memory for tpu_custom_call.1']
    %11 = vsyncpa [#allocation6], 0
    %s12 = scalar_lea.sflag [#allocation6], 1
    %13 = vsyncpa %s12, 0
    loop: start=0, step=1, limit=11
    $region2: #{tpu_custom_call.1} parent=1 // loop_pre_header
      _
    $region3: #{tpu_custom_call.1} parent=1 // loop_header
      %s15 = sphi 0, %s19
      %p16 = scmp.ge.s32.totalorder %s15, 11
      %s22 = sphi 0, %s34
      %s23 = sphi 0, %s30
      %s24 = sphi 0, %s22
      %s25 = sphi 0, %s23
      %s26 = sphi 0, %s24
      %s27 = sphi 0, %s25
      %s37 = sphi 0, %s39
      %s40 = sphi 0, %s37
      %s41 = sphi 0, %s40
      %s57 = sphi 0, %s41
      %s63 = sphi 0, %s65
      %s66 = sphi 0, %s63
      %s67 = sphi 0, %s66
      %s83 = sphi 0, %s67
      %s89 = sphi 0, %s91
      %s92 = sphi 0, %s89
      %s93 = sphi 0, %s92
      %s109 = sphi 0, %s93
      %s115 = sphi 0, %s117
      %s118 = sphi 0, %s115
      %s119 = sphi 0, %s118
      %s135 = sphi 0, %s119
      %s141 = sphi 0, %s143
      %s144 = sphi 0, %s141
      %s145 = sphi 0, %s144
      %s161 = sphi 0, %s145
      %s167 = sphi 0, %s169
      %s170 = sphi 0, %s167
      %s171 = sphi 0, %s170
      %s187 = sphi 0, %s171
      %s193 = sphi 0, %s195
      %s196 = sphi 0, %s193
      %s197 = sphi 0, %s196
      %s213 = sphi 0, %s197
    $region4: #{tpu_custom_call.1} parent=1 // loop_header_branch
      %18 = sbr.rel (%p16) target = $region8
    $region5: #{tpu_custom_call.1} parent=1 // loop_body
      %s20 = ssub.s32 %s15, 1
      %s21 = ssub.s32 %s15, 2
      %s28 = sadd.s32 1, %s23
      %p29 = scmp.ge.s32.totalorder %s28, 3
      %s30 = scalar_select %p29, 0, %s28
      %s31 = sadd.s32 1, %s22
      %s32 = scalar_select %p29, %s31, %s22
      %p33 = scmp.ge.s32.totalorder %s32, 3
      %s34 = scalar_select %p33, 0, %s32
      %s35 = ssub.s32 %s22, %s34
      %p36 = scmp.eq.s32.totalorder %s35, 0
      %s38 = sadd.s32 %s37, 1
      %s39 = scalar_select %p36, %s37, %s38
      %p42 = pneg %p36
      %p43 = scmp.eq.s32.totalorder %s15, 8
      %p44 = por %p42, %p43
      %p45 = scmp.ne.s32.totalorder %s37, %s40
      %p46 = scmp.eq.s32.totalorder %s15, 0
      %p47 = por %p45, %p46
      %p48 = scmp.ne.s32.totalorder %s37, %s40
      %p49 = scmp.eq.s32.totalorder %s20, 8
      %p50 = por %p48, %p49
      %p51 = scmp.ne.s32.totalorder %s40, %s41
      %p52 = scmp.eq.s32.totalorder %s20, 0
      %p53 = por %p51, %p52
      %p54 = scmp.ne.s32.totalorder %s40, %s41
      %p55 = scmp.eq.s32.totalorder %s21, 8
      %p56 = por %p54, %p55
      %p58 = scmp.ne.s32.totalorder %s41, %s57
      %p59 = scmp.eq.s32.totalorder %s21, 0
      %p60 = por %p58, %p59
      %s61 = ssub.s32 %s23, %s30
      %p62 = scmp.eq.s32.totalorder %s61, 0
      %s64 = sadd.s32 %s63, 1
      %s65 = scalar_select %p62, %s63, %s64
      %p68 = pneg %p62
      %p69 = scmp.eq.s32.totalorder %s15, 8
      %p70 = por %p68, %p69
      %p71 = scmp.ne.s32.totalorder %s63, %s66
      %p72 = scmp.eq.s32.totalorder %s15, 0
      %p73 = por %p71, %p72
      %p74 = scmp.ne.s32.totalorder %s63, %s66
      %p75 = scmp.eq.s32.totalorder %s20, 8
      %p76 = por %p74, %p75
      %p77 = scmp.ne.s32.totalorder %s66, %s67
      %p78 = scmp.eq.s32.totalorder %s20, 0
      %p79 = por %p77, %p78
      %p80 = scmp.ne.s32.totalorder %s66, %s67
      %p81 = scmp.eq.s32.totalorder %s21, 8
      %p82 = por %p80, %p81
      %p84 = scmp.ne.s32.totalorder %s67, %s83
      %p85 = scmp.eq.s32.totalorder %s21, 0
      %p86 = por %p84, %p85
      %s87 = ssub.s32 %s22, %s34
      %p88 = scmp.eq.s32.totalorder %s87, 0
      %s90 = sadd.s32 %s89, 1
      %s91 = scalar_select %p88, %s89, %s90
      %p94 = pneg %p88
      %p95 = scmp.eq.s32.totalorder %s15, 8
      %p96 = por %p94, %p95
      %p97 = scmp.ne.s32.totalorder %s89, %s92
      %p98 = scmp.eq.s32.totalorder %s15, 0
      %p99 = por %p97, %p98
      %p100 = scmp.ne.s32.totalorder %s89, %s92
      %p101 = scmp.eq.s32.totalorder %s20, 8
      %p102 = por %p100, %p101
      %p103 = scmp.ne.s32.totalorder %s92, %s93
      %p104 = scmp.eq.s32.totalorder %s20, 0
      %p105 = por %p103, %p104
      %p106 = scmp.ne.s32.totalorder %s92, %s93
      %p107 = scmp.eq.s32.totalorder %s21, 8
      %p108 = por %p106, %p107
      %p110 = scmp.ne.s32.totalorder %s93, %s109
      %p111 = scmp.eq.s32.totalorder %s21, 0
      %p112 = por %p110, %p111
      %s113 = ssub.s32 %s23, %s30
      %p114 = scmp.eq.s32.totalorder %s113, 0
      %s116 = sadd.s32 %s115, 1
      %s117 = scalar_select %p114, %s115, %s116
      %p120 = pneg %p114
      %p121 = scmp.eq.s32.totalorder %s15, 8
      %p122 = por %p120, %p121
      %p123 = scmp.ne.s32.totalorder %s115, %s118
      %p124 = scmp.eq.s32.totalorder %s15, 0
      %p125 = por %p123, %p124
      %p126 = scmp.ne.s32.totalorder %s115, %s118
      %p127 = scmp.eq.s32.totalorder %s20, 8
      %p128 = por %p126, %p127
      %p129 = scmp.ne.s32.totalorder %s118, %s119
      %p130 = scmp.eq.s32.totalorder %s20, 0
      %p131 = por %p129, %p130
      %p132 = scmp.ne.s32.totalorder %s118, %s119
      %p133 = scmp.eq.s32.totalorder %s21, 8
      %p134 = por %p132, %p133
      %p136 = scmp.ne.s32.totalorder %s119, %s135
      %p137 = scmp.eq.s32.totalorder %s21, 0
      %p138 = por %p136, %p137
      %s139 = ssub.s32 %s22, %s34
      %p140 = scmp.eq.s32.totalorder %s139, 0
      %s142 = sadd.s32 %s141, 1
      %s143 = scalar_select %p140, %s141, %s142
      %p146 = pneg %p140
      %p147 = scmp.eq.s32.totalorder %s15, 8
      %p148 = por %p146, %p147
      %p149 = scmp.ne.s32.totalorder %s141, %s144
      %p150 = scmp.eq.s32.totalorder %s15, 0
      %p151 = por %p149, %p150
      %p152 = scmp.ne.s32.totalorder %s141, %s144
      %p153 = scmp.eq.s32.totalorder %s20, 8
      %p154 = por %p152, %p153
      %p155 = scmp.ne.s32.totalorder %s144, %s145
      %p156 = scmp.eq.s32.totalorder %s20, 0
      %p157 = por %p155, %p156
      %p158 = scmp.ne.s32.totalorder %s144, %s145
      %p159 = scmp.eq.s32.totalorder %s21, 8
      %p160 = por %p158, %p159
      %p162 = scmp.ne.s32.totalorder %s145, %s161
      %p163 = scmp.eq.s32.totalorder %s21, 0
      %p164 = por %p162, %p163
      %s165 = ssub.s32 %s23, %s30
      %p166 = scmp.eq.s32.totalorder %s165, 0
      %s168 = sadd.s32 %s167, 1
      %s169 = scalar_select %p166, %s167, %s168
      %p172 = pneg %p166
      %p173 = scmp.eq.s32.totalorder %s15, 8
      %p174 = por %p172, %p173
      %p175 = scmp.ne.s32.totalorder %s167, %s170
      %p176 = scmp.eq.s32.totalorder %s15, 0
      %p177 = por %p175, %p176
      %p178 = scmp.ne.s32.totalorder %s167, %s170
      %p179 = scmp.eq.s32.totalorder %s20, 8
      %p180 = por %p178, %p179
      %p181 = scmp.ne.s32.totalorder %s170, %s171
      %p182 = scmp.eq.s32.totalorder %s20, 0
      %p183 = por %p181, %p182
      %p184 = scmp.ne.s32.totalorder %s170, %s171
      %p185 = scmp.eq.s32.totalorder %s21, 8
      %p186 = por %p184, %p185
      %p188 = scmp.ne.s32.totalorder %s171, %s187
      %p189 = scmp.eq.s32.totalorder %s21, 0
      %p190 = por %p188, %p189
      %s191 = ssub.s32 %s22, %s34
      %p192 = scmp.eq.s32.totalorder %s191, 0
      %s194 = sadd.s32 %s193, 1
      %s195 = scalar_select %p192, %s193, %s194
      %p198 = pneg %p192
      %p199 = scmp.eq.s32.totalorder %s15, 8
      %p200 = por %p198, %p199
      %p201 = scmp.ne.s32.totalorder %s193, %s196
      %p202 = scmp.eq.s32.totalorder %s15, 0
      %p203 = por %p201, %p202
      %p204 = scmp.ne.s32.totalorder %s193, %s196
      %p205 = scmp.eq.s32.totalorder %s20, 8
      %p206 = por %p204, %p205
      %p207 = scmp.ne.s32.totalorder %s196, %s197
      %p208 = scmp.eq.s32.totalorder %s20, 0
      %p209 = por %p207, %p208
      %p210 = scmp.ne.s32.totalorder %s196, %s197
      %p211 = scmp.eq.s32.totalorder %s21, 8
      %p212 = por %p210, %p211
      %p214 = scmp.ne.s32.totalorder %s197, %s213
      %p215 = scmp.eq.s32.totalorder %s21, 0
      %p216 = por %p214, %p215
      %p217 = scmp.le.s32.totalorder 1, %s15
      %p218 = scmp.lt.s32.totalorder %s15, 10
      %p219 = pnand %p217, %p218
      %p220 = pneg %p219
      // Predicated region
      $region9: #{tpu_custom_call.1} parent=5 // pred_check
        _
      $region10: #{tpu_custom_call.1} parent=5 // pred_check_branch
        %222 = sbr.rel (%p219) target = $region12
      $region11: #{tpu_custom_call.1} parent=5 // pred_region
        %s223 = ssub.s32 %s15, 1
      $region12: #{tpu_custom_call.1} parent=5 // pred_fallthru
        _
      %p224 = scmp.lt.s32.totalorder %s15, 9
      // Predicated region
      $region13: #{tpu_custom_call.1} parent=5 // pred_check
        %p225 = pneg %p224
      $region14: #{tpu_custom_call.1} parent=5 // pred_check_branch
        %227 = sbr.rel (%p225) target = $region16
      $region15: #{tpu_custom_call.1} parent=5 // pred_region
        // Predicated region
        $region17: #{tpu_custom_call.1} parent=15 // pred_check
          %p228 = pneg %p47
        $region18: #{tpu_custom_call.1} parent=15 // pred_check_branch
          %230 = sbr.rel (%p228) target = $region20
        $region19: #{tpu_custom_call.1} parent=15 // pred_region
          %p231 = scmp.lt.s32.totalorder %s22, 2
          %s232 = scalar_select %p231, %s22, 2
          %s233 = smul.addr %s232, 8
          %s234 = scalar_lea.vmem %s0, %s233
        $region20: #{tpu_custom_call.1} parent=15 // pred_fallthru
          _
        // Predicated region
        $region21: #{tpu_custom_call.1} parent=15 // pred_check
          %p235 = pneg %p73
        $region22: #{tpu_custom_call.1} parent=15 // pred_check_branch
          %237 = sbr.rel (%p235) target = $region24
        $region23: #{tpu_custom_call.1} parent=15 // pred_region
          %s238 = sand.u32 %s63, 1
          %s239 = scalar_lea.sflag [#allocation6], %s238
          %s240 = sand.u32 %s63, 1
          %s241 = smul.addr %s240, 128
          %s242 = scalar_lea.vmem [#allocation5], %s241
          %s244 = ssub.s32 2048, 2048
          %245 = vsyncadd %s239, %s244
          %s246 = smul.addr %s23, 128
          %s247 = scalar_lea.hbm %s1, %s246
          %s248 = sshll.u32 %s242, 4
          %s249 = int_to_ptr.vmem [resolvable:$true] %s248
          %254 = dma.hbm_to_vmem [thread:$0]  %s247, 2048, %s249, %s239, 384, 128, 8
        $region24: #{tpu_custom_call.1} parent=15 // pred_fallthru
          _
        // Predicated region
        $region25: #{tpu_custom_call.1} parent=15 // pred_check
          %p255 = pneg %p99
        $region26: #{tpu_custom_call.1} parent=15 // pred_check_branch
          %257 = sbr.rel (%p255) target = $region28
        $region27: #{tpu_custom_call.1} parent=15 // pred_region
          %p258 = scmp.lt.s32.totalorder %s22, 2
          %s259 = scalar_select %p258, %s22, 2
          %s260 = smul.addr %s259, 8
          %s261 = scalar_lea.vmem %s2, %s260
        $region28: #{tpu_custom_call.1} parent=15 // pred_fallthru
          _
        // Predicated region
        $region29: #{tpu_custom_call.1} parent=15 // pred_check
          %p262 = pneg %p125
        $region30: #{tpu_custom_call.1} parent=15 // pred_check_branch
          %264 = sbr.rel (%p262) target = $region32
        $region31: #{tpu_custom_call.1} parent=15 // pred_region
          %p265 = scmp.lt.s32.totalorder %s23, 2
          %s266 = scalar_select %p265, %s23, 2
          %s267 = scalar_lea.vmem %s3, %s266
        $region32: #{tpu_custom_call.1} parent=15 // pred_fallthru
          _
        // Predicated region
        $region33: #{tpu_custom_call.1} parent=15 // pred_check
          %p268 = pneg %p151
        $region34: #{tpu_custom_call.1} parent=15 // pred_check_branch
          %270 = sbr.rel (%p268) target = $region36
        $region35: #{tpu_custom_call.1} parent=15 // pred_region
          %p271 = scmp.lt.s32.totalorder %s22, 2
          %s272 = scalar_select %p271, %s22, 2
          %s273 = smul.addr %s272, 8
          %s274 = scalar_lea.vmem %s4, %s273
        $region36: #{tpu_custom_call.1} parent=15 // pred_fallthru
          _
        // Predicated region
        $region37: #{tpu_custom_call.1} parent=15 // pred_check
          %p275 = pneg %p177
        $region38: #{tpu_custom_call.1} parent=15 // pred_check_branch
          %277 = sbr.rel (%p275) target = $region40
        $region39: #{tpu_custom_call.1} parent=15 // pred_region
          %p278 = scmp.lt.s32.totalorder %s23, 2
          %s279 = scalar_select %p278, %s23, 2
          %s280 = scalar_lea.vmem %s5, %s279
        $region40: #{tpu_custom_call.1} parent=15 // pred_fallthru
          _
      $region16: #{tpu_custom_call.1} parent=5 // pred_fallthru
        _
      %p281 = scmp.le.s32.totalorder 1, %s15
      %p282 = scmp.lt.s32.totalorder %s15, 10
      %p283 = pnand %p281, %p282
      %p284 = pneg %p283
      // Predicated region
      $region41: #{tpu_custom_call.1} parent=5 // pred_check
        _
      $region42: #{tpu_custom_call.1} parent=5 // pred_check_branch
        %286 = sbr.rel (%p283) target = $region44
      $region43: #{tpu_custom_call.1} parent=5 // pred_region
        %s287 = ssub.s32 %s15, 1
        %s288 = sand.u32 %s66, 1
        %s289 = scalar_lea.sflag [#allocation6], %s288
        %s290 = sand.u32 %s66, 1
        %s291 = smul.addr %s290, 128
        %s292 = scalar_lea.vmem [#allocation5], %s291
        // Predicated region
        $region45: #{tpu_custom_call.1} parent=43 // pred_check
          %p293 = pneg %p79
        $region46: #{tpu_custom_call.1} parent=43 // pred_check_branch
          %295 = sbr.rel (%p293) target = $region48
        $region47: #{tpu_custom_call.1} parent=43 // pred_region
          %296 = dma.done %s289, 2048
        $region48: #{tpu_custom_call.1} parent=43 // pred_fallthru
          _
        %p297 = scmp.lt.s32.totalorder %s24, 2
        %s298 = scalar_select %p297, %s24, 2
        %s299 = smul.addr %s298, 8
        %s300 = scalar_lea.vmem %s0, %s299
        %p301 = pneg %p53
        %p302 = pneg %p50
        %s303 = sand.u32 %s66, 1
        %s304 = scalar_lea.sflag [#allocation6], %s303
        %s305 = sand.u32 %s66, 1
        %s306 = smul.addr %s305, 128
        %s307 = scalar_lea.vmem [#allocation5], %s306
        %p308 = pneg %p79
        %p309 = pneg %p76
        %p310 = scmp.lt.s32.totalorder %s24, 2
        %s311 = scalar_select %p310, %s24, 2
        %s312 = smul.addr %s311, 8
        %s313 = scalar_lea.vmem %s2, %s312
        %p314 = pneg %p105
        %p315 = pneg %p102
        %p316 = scmp.lt.s32.totalorder %s25, 2
        %s317 = scalar_select %p316, %s25, 2
        %s318 = scalar_lea.vmem %s3, %s317
        %p319 = pneg %p131
        %p320 = pneg %p128
        %p321 = scmp.lt.s32.totalorder %s24, 2
        %s322 = scalar_select %p321, %s24, 2
        %s323 = smul.addr %s322, 8
        %s324 = scalar_lea.vmem %s4, %s323
        %p325 = pneg %p157
        %p326 = pneg %p154
        %p327 = scmp.lt.s32.totalorder %s25, 2
        %s328 = scalar_select %p327, %s25, 2
        %s329 = scalar_lea.vmem %s5, %s328
        %p330 = pneg %p183
        %p331 = pneg %p180
        %p332 = pneg %p209
        %p333 = pneg %p206
        %p334 = scmp.lt.s32.totalorder %s24, 2
        %s335 = scalar_select %p334, %s24, 2
        %s336 = smul.addr %s335, 8
        %s337 = scalar_lea.vmem %s6, %s336
        %p338 = scmp.lt.s32.totalorder %s24, 2
        %s339 = scalar_select %p338, %s24, 2
        %s340 = smul.addr %s339, 8
        %s341 = scalar_lea.vmem %s0, %s340
        %p342 = scmp.lt.s32.totalorder %s24, 2
        %s343 = scalar_select %p342, %s24, 2
        %s344 = smul.addr %s343, 8
        %s345 = scalar_lea.vmem %s2, %s344
        %p346 = scmp.lt.s32.totalorder %s25, 2
        %s347 = scalar_select %p346, %s25, 2
        %s348 = scalar_lea.vmem %s3, %s347
        %p349 = scmp.lt.s32.totalorder %s24, 2
        %s350 = scalar_select %p349, %s24, 2
        %s351 = smul.addr %s350, 8
        %s352 = scalar_lea.vmem %s4, %s351
        %p353 = scmp.lt.s32.totalorder %s25, 2
        %s354 = scalar_select %p353, %s25, 2
        %s355 = scalar_lea.vmem %s5, %s354
        %p356 = scmp.lt.s32.totalorder %s24, 2
        %s357 = scalar_select %p356, %s24, 2
        %s358 = smul.addr %s357, 8
        %s359 = scalar_lea.vmem %s6, %s358
        %p360 = scmp.eq.s32.totalorder %s25, 0
        // Predicated region
        $region49: #{tpu_custom_call.1} parent=43 // pred_check
          %p361 = pneg %p360
        $region50: #{tpu_custom_call.1} parent=43 // pred_check_branch
          %363 = sbr.rel (%p361) target = $region52
        $region51: #{tpu_custom_call.1} parent=43 // pred_region
          %vm364 = vcmask 7168
          %365 = vst.msk [vmem:[#allocation2] sm:$0xff] %vm364, -inf
          %366 = vst.msk [vmem:[#allocation3] sm:$0xff] %vm364, 0.0
          %367 = vst.msk [vmem:[#allocation4] sm:$0xff] %vm364, 0.0
        $region52: #{tpu_custom_call.1} parent=43 // pred_fallthru
          _
        %v368 = vld [vmem:[%s341] sm:$0xff]
        %v369 = vld [vmem:[%s292] sm:$0xff]
        %v370 = vld [vmem:[%s292 + $0x8] sm:$0xff]
        %v371 = vld [vmem:[%s292 + $0x10] sm:$0xff]
        %v372 = vld [vmem:[%s292 + $0x18] sm:$0xff]
        %v373 = vld [vmem:[%s292 + $0x20] sm:$0xff]
        %v374 = vld [vmem:[%s292 + $0x28] sm:$0xff]
        %v375 = vld [vmem:[%s292 + $0x30] sm:$0xff]
        %v376 = vld [vmem:[%s292 + $0x38] sm:$0xff]
        %v377 = vld [vmem:[%s292 + $0x40] sm:$0xff]
        %v378 = vld [vmem:[%s292 + $0x48] sm:$0xff]
        %v379 = vld [vmem:[%s292 + $0x50] sm:$0xff]
        %v380 = vld [vmem:[%s292 + $0x58] sm:$0xff]
        %v381 = vld [vmem:[%s292 + $0x60] sm:$0xff]
        %v382 = vld [vmem:[%s292 + $0x68] sm:$0xff]
        %v383 = vld [vmem:[%s292 + $0x70] sm:$0xff]
        %v384 = vld [vmem:[%s292 + $0x78] sm:$0xff]
        %385 = vmatprep.subr.mxu0 0.0
        %386 = vmatpush1.msra.mxu0 %v384
        %387 = vmatprep.subr.mxu0 0.0
        %388 = vmatpush1.msra.mxu0 %v383
        %389 = vmatprep.subr.mxu0 0.0
        %390 = vmatpush1.msra.mxu0 %v382
        %391 = vmatprep.subr.mxu0 0.0
        %392 = vmatpush1.msra.mxu0 %v381
        %393 = vmatprep.subr.mxu0 0.0
        %394 = vmatpush1.msra.mxu0 %v380
        %395 = vmatprep.subr.mxu0 0.0
        %396 = vmatpush1.msra.mxu0 %v379
        %397 = vmatprep.subr.mxu0 0.0
        %398 = vmatpush1.msra.mxu0 %v378
        %399 = vmatprep.subr.mxu0 0.0
        %400 = vmatpush1.msra.mxu0 %v377
        %401 = vmatprep.subr.mxu0 0.0
        %402 = vmatpush1.msra.mxu0 %v376
        %403 = vmatprep.subr.mxu0 0.0
        %404 = vmatpush1.msra.mxu0 %v375
        %405 = vmatprep.subr.mxu0 0.0
        %406 = vmatpush1.msra.mxu0 %v374
        %407 = vmatprep.subr.mxu0 0.0
        %408 = vmatpush1.msra.mxu0 %v373
        %409 = vmatprep.subr.mxu0 0.0
        %410 = vmatpush1.msra.mxu0 %v372
        %411 = vmatprep.subr.mxu0 0.0
        %412 = vmatpush1.msra.mxu0 %v371
        %413 = vmatprep.subr.mxu0 0.0
        %414 = vmatpush1.msra.mxu0 %v370
        %415 = vmatprep.subr.mxu0 0.0
        %416 = vmatpush1.msra.mxu0 %v369
        %417 = vmatprep.subr.mxu0 0.0
        %418 = vmatpush2.msra.mxu0 0.0
        %419 = vmatprep.subr.mxu0 0.0
        %420 = vmatpush2.msra.mxu0 0.0
        %421 = vmatprep.subr.mxu0 0.0
        %422 = vmatpush2.msra.mxu0 0.0
        %423 = vmatprep.subr.mxu0 0.0
        %424 = vmatpush2.msra.mxu0 0.0
        %425 = vmatprep.subr.mxu0 0.0
        %426 = vmatpush2.msra.mxu0 0.0
        %427 = vmatprep.subr.mxu0 0.0
        %428 = vmatpush2.msra.mxu0 0.0
        %429 = vmatprep.subr.mxu0 0.0
        %430 = vmatpush2.msra.mxu0 0.0
        %431 = vmatprep.subr.mxu0 0.0
        %432 = vmatpush2.msra.mxu0 0.0
        %433 = vmatprep.subr.mxu0 0.0
        %434 = vmatpush2.msra.mxu0 0.0
        %435 = vmatprep.subr.mxu0 0.0
        %436 = vmatpush2.msra.mxu0 0.0
        %437 = vmatprep.subr.mxu0 0.0
        %438 = vmatpush2.msra.mxu0 0.0
        %439 = vmatprep.subr.mxu0 0.0
        %440 = vmatpush2.msra.mxu0 0.0
        %441 = vmatprep.subr.mxu0 0.0
        %442 = vmatpush2.msra.mxu0 0.0
        %443 = vmatprep.subr.mxu0 0.0
        %444 = vmatpush2.msra.mxu0 0.0
        %445 = vmatprep.subr.mxu0 0.0
        %446 = vmatpush2.msra.mxu0 0.0
        %447 = vmatprep.subr.mxu0 0.0
        %448 = vmatpush2.msra.mxu0 0.0
        %449 = vmatprep.mubr.f32.mxu0 0.0
        %450 = vmatmul.mubr.f32.gmra.mxu0 %v368
        %v451 = vpop.f32.mrf.mxu0
        %v452 = vadd.f32 0.0, %v451
        %v453 = vpop.f32.mrf.mxu0
        %454 = vdwg.mxu0
        %v455 = vld [vmem:[%s345] sm:$0xff]
        %v456 = vmul.f32 %v452, 2.0
        %458 = vset.pattern.permute.xlu0 0
        %459 = vperm.xlu0 %458, %v455
        %v460 = vpop.permute.xlu0 %459
        %v462 = vsub.f32 %v460, %v456
        %v463 = vld [vmem:[%s348] sm:$0x1]
        %v465 = vlaneseq
        %v466 = vshrl.u32 %v465, 7
        %v467 = vsub.s32 0, %v466
        %v468 = vrot.slane %v463, %v467
        %v470 = vadd.f32 %v462, %v468
        %v471 = vmax.f32 %v470, 0.0
        %v472 = vrsqrt.pop %v471
        %v473 = vmul.f32 %v471, %v472
        %vm474 = vcmp.eq.f32.partialorder %v471, inf
        %v475 = vsel %vm474, %v471, %v473
        %vm476 = vcmp.eq.f32.partialorder %v471, 0.0
        %v477 = vand.u32 %v471, 2147483648
        %v478 = vsel %vm476, %v477, %v475
        %v479 = vmul.f32 %v478, -1.0
        %v480 = vld [vmem:[%s352] sm:$0xff]
        %v481 = vld [vmem:[%s355] sm:$0x1]
        %482 = vset.pattern.permute.xlu0 0
        %483 = vperm.xlu0 %482, %v480
        %v484 = vpop.permute.xlu0 %483
        %v485 = vlaneseq
        %v486 = vshrl.u32 %v485, 7
        %v487 = vsub.s32 0, %v486
        %v488 = vrot.slane %v481, %v487
        %vm489 = vcmp.eq.s32.totalorder %v484, %v488
        %490 = vmax.xlane.f32.xlu0 %v479
        %v491 = vpop.xlane.xlu0 %490
        %v492 = vld [vmem:[#allocation2] sm:$0xff]
        %v493 = vmax.f32 %v492, %v491
        %v494 = vsub.f32 %v492, %v493
        %v495 = vmul.f32 %v494, 1.442695
        %v496 = vpow.pop %v495
        %498 = vset.pattern.permute.xlu0 0
        %499 = vperm.xlu0 %498, %v493
        %v500 = vpop.permute.xlu0 %499
        %v502 = vsub.f32 %v479, %v500
        %v503 = vmul.f32 %v502, 1.442695
        %v504 = vpow.pop %v503
        %v505 = vld [vmem:[#allocation4] sm:$0xff]
        %v506 = vmul.f32 %v496, %v505
        %507 = vadd.xlane.f32.xlu0 %v504
        %v508 = vpop.xlane.xlu0 %507
        %v509 = vadd.f32 %v506, %v508
        %vm510 = vcmask 7168
        %511 = vst.msk [vmem:[#allocation4] sm:$0xff] %vm510, %v509
        %v512 = vld [vmem:[#allocation3] sm:$0xff]
        %v513 = vmul.f32 %v496, %v512
        %v514 = vsel %vm489, %v504, 0.0
        %515 = vadd.xlane.f32.xlu0 %v514
        %v516 = vpop.xlane.xlu0 %515
        %v517 = vadd.f32 %v513, %v516
        %518 = vst.msk [vmem:[#allocation3] sm:$0xff] %vm510, %v517
        %519 = vst.msk [vmem:[#allocation2] sm:$0xff] %vm510, %v493
        %p520 = scmp.eq.s32.totalorder %s25, 2
        // Predicated region
        $region53: #{tpu_custom_call.1} parent=43 // pred_check
          %p521 = pneg %p520
        $region54: #{tpu_custom_call.1} parent=43 // pred_check_branch
          %523 = sbr.rel (%p521) target = $region56
        $region55: #{tpu_custom_call.1} parent=43 // pred_region
          %v524 = vld [vmem:[#allocation3] sm:$0xff]
          %v525 = vld [vmem:[#allocation4] sm:$0xff]
          %v526 = vrcp.pop %v525
          %v527 = vmul.f32 %v524, %v526
          %v528 = vadd.f32 %v527, 1e-06
          %v529 = vlog2.pop %v528
          %v530 = vmul.f32 %v529, 0.6931472
          %v531 = vsub.f32 0.0, %v530
          %532 = vst.msk [vmem:[%s359] sm:$0xff] %vm510, %v531
        $region56: #{tpu_custom_call.1} parent=43 // pred_fallthru
          _
        %p533 = scmp.lt.s32.totalorder %s24, 2
        %s534 = scalar_select %p533, %s24, 2
        %s535 = smul.addr %s534, 8
        %s536 = scalar_lea.vmem %s6, %s535
        // Predicated region
        $region57: #{tpu_custom_call.1} parent=43 // pred_check
          %p537 = pneg %p206
        $region58: #{tpu_custom_call.1} parent=43 // pred_check_branch
          %539 = sbr.rel (%p537) target = $region60
        $region59: #{tpu_custom_call.1} parent=43 // pred_region
          _
        $region60: #{tpu_custom_call.1} parent=43 // pred_fallthru
          _
      $region44: #{tpu_custom_call.1} parent=5 // pred_fallthru
        _
      %p540 = scmp.le.s32.totalorder 2, %s15
      // Predicated region
      $region61: #{tpu_custom_call.1} parent=5 // pred_check
        %p541 = pneg %p540
      $region62: #{tpu_custom_call.1} parent=5 // pred_check_branch
        %543 = sbr.rel (%p541) target = $region64
      $region63: #{tpu_custom_call.1} parent=5 // pred_region
        %s544 = ssub.s32 %s15, 2
        // Predicated region
        $region65: #{tpu_custom_call.1} parent=63 // pred_check
          %p545 = pneg %p212
        $region66: #{tpu_custom_call.1} parent=63 // pred_check_branch
          %547 = sbr.rel (%p545) target = $region68
        $region67: #{tpu_custom_call.1} parent=63 // pred_region
          %p548 = scmp.lt.s32.totalorder %s26, 2
          %s549 = scalar_select %p548, %s26, 2
          %s550 = smul.addr %s549, 8
          %s551 = scalar_lea.vmem %s6, %s550
        $region68: #{tpu_custom_call.1} parent=63 // pred_fallthru
          _
      $region64: #{tpu_custom_call.1} parent=5 // pred_fallthru
        _
    $region6: #{tpu_custom_call.1} parent=1 // loop_footer
      %s19 = sadd.s32 1, %s15
    $region7: #{tpu_custom_call.1} parent=1 // loop_footer_branch
      %14 = sbr.rel target = $region3
    $region8: #{tpu_custom_call.1} parent=1 // loop_exit
      _
    %552 = vsyncpa [#allocation6], 1
    %s553 = scalar_lea.sflag [#allocation6], 1
    %554 = vsyncpa %s553, 1

</llo_original>
